<compile_context>
chip_gen: v7x
topology: tpu7x:2x2x1
jax: 0.10.0
libtpu: 0.0.40
codegen_flags: <defaults>
</compile_context>

<pallas_src>
import functools

import jax
import jax.numpy as jnp
from jax import lax
from jax.experimental import pallas as pl
from jax.experimental.pallas import tpu as pltpu

IN_FEATURES, H1, H2, OUT_FEATURES = 5, 7, 7, 3
TILE_ALIGN = 128  # output block's lane (last) dim must be a multiple of 128


def _round_up(n, m):
    return ((n + m - 1) // m) * m


@functools.lru_cache(maxsize=None)
def _hw_defaults():
    """(max_tile_rows, vmem_limit_bytes); conservative for unknown parts."""
    try:
        kind = jax.devices()[0].device_kind.lower()
    except Exception:  # pragma: no cover - defensive
        kind = ""
    if "v5" in kind or "v6" in kind:          # 128 MiB physical VMEM parts
        return 16384, 64 * 1024 * 1024
    return 8192, 48 * 1024 * 1024              # v7x (64 MiB / 2 TCs) & unknown


def _choose_tile(batch):
    """Rows per batch tile.

    Small batches: one full-extent block (full-dim blocks are legal at any
    size). Large batches: a 128-aligned tile that (a) gives at least 2 grid
    steps so v7x's second TensorCore gets work, and (b) is capped by the
    per-generation VMEM budget.
    """
    max_tile, _ = _hw_defaults()
    if batch <= 2 * TILE_ALIGN:
        return batch
    return min(max_tile, _round_up(pl.cdiv(batch, 2), TILE_ALIGN))


def mlp_kernel(x_ref, p1_ref, p2_ref, p3_ref, o_ref):
    # x_ref : (TILE_B, IN)   batch-major input tile (contiguous HBM read).
    # pk_ref: (out_k, in_k+1) = [W_k | b_k], native PyTorch (out, in) layout.
    # o_ref : (OUT, TILE_B)  feature-major output tile (lane axis = batch).
    x = x_ref[...]                                               # (TILE_B, IN)

    w1, b1 = p1_ref[:, :IN_FEATURES], p1_ref[:, IN_FEATURES:]   # (H1,IN),(H1,1)
    w2, b2 = p2_ref[:, :H1], p2_ref[:, H1:]                     # (H2,H1),(H2,1)
    w3, b3 = p3_ref[:, :H2], p3_ref[:, H2:]                     # (OUT,H2),(OUT,1)

    # Layer 1: contract x's feature axis directly (w1 @ x^T); the transposed
    # contraction is folded into the matmul (same pattern as 'qd,kd->qk').
    h = lax.dot_general(w1, x, (((1,), (1,)), ((), ())),
                        preferred_element_type=jnp.float32) + b1  # (H1, TILE_B)
    h = jnp.maximum(h, 0.0)                                       # ReLU

    h = jnp.dot(w2, h, preferred_element_type=jnp.float32) + b2   # (H2, TILE_B)
    h = jnp.maximum(h, 0.0)                                       # ReLU

    out = jnp.dot(w3, h, preferred_element_type=jnp.float32) + b3 # (OUT, TILE_B)
    o_ref[...] = out.astype(o_ref.dtype)                          # lane-dense store


def prepare_params(params):
    """One-time packing: per layer, concat native-layout W (out,in) with the
    bias as a trailing column -> (out, in+1). No transposes needed."""
    def pack(w, b):
        return jnp.concatenate([w, b[:, None]], axis=1)
    return (pack(params["fc1_w"], params["fc1_b"]),
            pack(params["fc2_w"], params["fc2_b"]),
            pack(params["out_w"], params["out_b"]))


@jax.jit
def mlp_forward(x, prepared):
    """x: (B, 5) f32 -> (B, 3) f32, matching the PyTorch Model.forward."""
    p1, p2, p3 = prepared
    batch = x.shape[0]
    tile_b = _choose_tile(batch)
    grid = (pl.cdiv(batch, tile_b),)        # ragged last block handled by Pallas
    _, vmem_limit = _hw_defaults()

    const = lambda a: pl.BlockSpec(a.shape, lambda i: (0, 0))  # resident params

    flops = 2 * batch * (IN_FEATURES * H1 + H1 * H2 + H2 * OUT_FEATURES)
    bytes_accessed = 4 * (batch * (IN_FEATURES + OUT_FEATURES)
                          + p1.size + p2.size + p3.size)       # advisory only

    out_fm = pl.pallas_call(
        mlp_kernel,
        out_shape=jax.ShapeDtypeStruct((OUT_FEATURES, batch), jnp.float32),
        grid=grid,
        in_specs=[
            pl.BlockSpec((tile_b, IN_FEATURES), lambda i: (i, 0)),
            const(p1), const(p2), const(p3),
        ],
        out_specs=pl.BlockSpec((OUT_FEATURES, tile_b), lambda i: (0, i)),
        compiler_params=pltpu.CompilerParams(
            dimension_semantics=("parallel",),   # shard batch tiles over TCs (v7x)
            vmem_limit_bytes=vmem_limit,
        ),
        cost_estimate=pl.CostEstimate(
            flops=flops, transcendentals=0, bytes_accessed=bytes_accessed),
    )(x, p1, p2, p3)

    # Only the small (3, B) result is transposed back to the module's (B, 3)
    # convention; x itself is never copied/padded in the wrapper.
    return out_fm.T


def init_params(key, in_features=IN_FEATURES, h1=H1, h2=H2, out_features=OUT_FEATURES):
    """Deterministic init matching PyTorch nn.Linear shapes: W (out,in), b (out,)."""
    ks = jax.random.split(key, 6)

    def lin(kw, kb, fan_in, fan_out):
        bound = 1.0 / jnp.sqrt(fan_in)
        w = jax.random.uniform(kw, (fan_out, fan_in), jnp.float32, -bound, bound)
        b = jax.random.uniform(kb, (fan_out,), jnp.float32, -bound, bound)
        return w, b

    w1, b1 = lin(ks[0], ks[1], in_features, h1)
    w2, b2 = lin(ks[2], ks[3], h1, h2)
    w3, b3 = lin(ks[4], ks[5], h2, out_features)
    return {"fc1_w": w1, "fc1_b": b1,
            "fc2_w": w2, "fc2_b": b2,
            "out_w": w3, "out_b": b3}


def reference_forward(x, p):
    h = jnp.maximum(x @ p["fc1_w"].T + p["fc1_b"], 0.0)
    h = jnp.maximum(h @ p["fc2_w"].T + p["fc2_b"], 0.0)
    return h @ p["out_w"].T + p["out_b"]


if __name__ == "__main__":
    key = jax.random.PRNGKey(0)
    k_x, k_x2, k_p = jax.random.split(key, 3)

    params = init_params(k_p)
    prepared = prepare_params(params)   # hoisted out of the hot path

    # Small batch (single full-extent block).
    x_small = jax.random.normal(k_x, (8, IN_FEATURES), jnp.float32)
    out_small = jax.block_until_ready(mlp_forward(x_small, prepared))
    ref_small = reference_forward(x_small, params)
    assert out_small.shape == (8, OUT_FEATURES)
    assert jnp.allclose(out_small, ref_small, atol=1e-5, rtol=1e-5), "small-batch mismatch"

    # Larger, non-divisible batch: exercises the multi-step grid and the
    # ragged (masked) last block with no wrapper-side padding/slicing.
    x_big = jax.random.normal(k_x2, (1000, IN_FEATURES), jnp.float32)
    out_big = jax.block_until_ready(mlp_forward(x_big, prepared))
    ref_big = reference_forward(x_big, params)
    assert out_big.shape == (1000, OUT_FEATURES)
    assert jnp.allclose(out_big, ref_big, atol=1e-5, rtol=1e-5), "big-batch mismatch"

    print("KERNEL_OK")
</pallas_src>

<mosaic_0001>
module attributes {stable_mosaic.version = 11 : i64} {
  func.func @mlp_kernel(%arg0: i32, %arg1: memref<8x5xf32, #tpu.memory_space<vmem>>, %arg2: memref<7x6xf32, #tpu.memory_space<vmem>>, %arg3: memref<7x8xf32, #tpu.memory_space<vmem>>, %arg4: memref<3x8xf32, #tpu.memory_space<vmem>>, %arg5: memref<3x8xf32, #tpu.memory_space<vmem>>) attributes {dimension_semantics = [#tpu.dimension_semantics<parallel>], iteration_bounds = array<i64: 1>, scalar_prefetch = 0 : i64, scratch_operands = 0 : i64, tpu.core_type = #tpu.core_type<tc>, window_params = [{transform_indices = @transform_0, window_bounds = array<i64: 8, 5>}, {pipeline_mode = #tpu.pipeline_mode<synchronous>, transform_indices = @transform_1, window_bounds = array<i64: 7, 6>}, {pipeline_mode = #tpu.pipeline_mode<synchronous>, transform_indices = @transform_2, window_bounds = array<i64: 7, 8>}, {pipeline_mode = #tpu.pipeline_mode<synchronous>, transform_indices = @transform_3, window_bounds = array<i64: 3, 8>}, {transform_indices = @transform_4, window_bounds = array<i64: 3, 8>}]} {
    %c0 = arith.constant 0 : index
    %c0_0 = arith.constant 0 : index
    %0 = vector.load %arg1[%c0, %c0_0] : memref<8x5xf32, #tpu.memory_space<vmem>>, vector<8x5xf32>
    %c0_1 = arith.constant 0 : index
    %c0_2 = arith.constant 0 : index
    %1 = vector.load %arg2[%c0_1, %c0_2] : memref<7x6xf32, #tpu.memory_space<vmem>>, vector<7x5xf32>
    %c0_3 = arith.constant 0 : index
    %c5 = arith.constant 5 : index
    %2 = vector.load %arg2[%c0_3, %c5] : memref<7x6xf32, #tpu.memory_space<vmem>>, vector<7x1xf32>
    %c0_4 = arith.constant 0 : index
    %c0_5 = arith.constant 0 : index
    %3 = vector.load %arg3[%c0_4, %c0_5] : memref<7x8xf32, #tpu.memory_space<vmem>>, vector<7x7xf32>
    %c0_6 = arith.constant 0 : index
    %c7 = arith.constant 7 : index
    %4 = vector.load %arg3[%c0_6, %c7] : memref<7x8xf32, #tpu.memory_space<vmem>>, vector<7x1xf32>
    %c0_7 = arith.constant 0 : index
    %c0_8 = arith.constant 0 : index
    %5 = vector.load %arg4[%c0_7, %c0_8] : memref<3x8xf32, #tpu.memory_space<vmem>>, vector<3x7xf32>
    %c0_9 = arith.constant 0 : index
    %c7_10 = arith.constant 7 : index
    %6 = vector.load %arg4[%c0_9, %c7_10] : memref<3x8xf32, #tpu.memory_space<vmem>>, vector<3x1xf32>
    %cst = arith.constant dense<0.000000e+00> : vector<7x8xf32>
    %7 = tpu.matmul %1, %0, %cst {dimension_numbers = #tpu.dot_dimension_numbers<[1], [1], [0], [0], [0, 0, 1, 0], [], []>} : vector<7x5xf32>, vector<8x5xf32>, vector<7x8xf32> -> vector<7x8xf32>
    %8 = vector.broadcast %2 : vector<7x1xf32> to vector<7x8xf32>
    %9 = arith.addf %7, %8 : vector<7x8xf32>
    %cst_11 = arith.constant 0.000000e+00 : f32
    %10 = vector.broadcast %cst_11 : f32 to vector<7x8xf32>
    %11 = arith.maximumf %9, %10 : vector<7x8xf32>
    %cst_12 = arith.constant dense<0.000000e+00> : vector<7x8xf32>
    %12 = tpu.matmul %3, %11, %cst_12 {dimension_numbers = #tpu.dot_dimension_numbers<[1], [0], [0], [1], [0, 0, 1, 1], [], []>} : vector<7x7xf32>, vector<7x8xf32>, vector<7x8xf32> -> vector<7x8xf32>
    %13 = vector.broadcast %4 : vector<7x1xf32> to vector<7x8xf32>
    %14 = arith.addf %12, %13 : vector<7x8xf32>
    %cst_13 = arith.constant 0.000000e+00 : f32
    %15 = vector.broadcast %cst_13 : f32 to vector<7x8xf32>
    %16 = arith.maximumf %14, %15 : vector<7x8xf32>
    %cst_14 = arith.constant dense<0.000000e+00> : vector<3x8xf32>
    %17 = tpu.matmul %5, %16, %cst_14 {dimension_numbers = #tpu.dot_dimension_numbers<[1], [0], [0], [1], [0, 0, 1, 1], [], []>} : vector<3x7xf32>, vector<7x8xf32>, vector<3x8xf32> -> vector<3x8xf32>
    %18 = vector.broadcast %6 : vector<3x1xf32> to vector<3x8xf32>
    %19 = arith.addf %17, %18 : vector<3x8xf32>
    %c0_15 = arith.constant 0 : index
    %c0_16 = arith.constant 0 : index
    %20 = vector.load %arg5[%c0_15, %c0_16] : memref<3x8xf32, #tpu.memory_space<vmem>>, vector<3x8xf32>
    tpu.vector_store %arg5[%c0_15, %c0_16], %19 {strides = array<i32>} : memref<3x8xf32, #tpu.memory_space<vmem>>, vector<3x8xf32>,
    return
  }
  func.func @transform_0(%arg0: i32) -> (i32, i32) {
    %c0_i32 = arith.constant 0 : i32
    %c0_i32_0 = arith.constant 0 : i32
    return %arg0, %c0_i32 : i32, i32
  }
  func.func @transform_1(%arg0: i32) -> (i32, i32) {
    %c0_i32 = arith.constant 0 : i32
    %c0_i32_0 = arith.constant 0 : i32
    %c0_i32_1 = arith.constant 0 : i32
    return %c0_i32, %c0_i32_0 : i32, i32
  }
  func.func @transform_2(%arg0: i32) -> (i32, i32) {
    %c0_i32 = arith.constant 0 : i32
    %c0_i32_0 = arith.constant 0 : i32
    %c0_i32_1 = arith.constant 0 : i32
    return %c0_i32, %c0_i32_0 : i32, i32
  }
  func.func @transform_3(%arg0: i32) -> (i32, i32) {
    %c0_i32 = arith.constant 0 : i32
    %c0_i32_0 = arith.constant 0 : i32
    %c0_i32_1 = arith.constant 0 : i32
    return %c0_i32, %c0_i32_0 : i32, i32
  }
  func.func @transform_4(%arg0: i32) -> (i32, i32) {
    %c0_i32 = arith.constant 0 : i32
    %c0_i32_0 = arith.constant 0 : i32
    return %c0_i32, %arg0 : i32, i32
  }
}

</mosaic_0001>

<llo_original>
// kernel: mlp_forward.1
$region0: #{mlp_forward.1}
  #allocation0 [shape = 'u32[]', space=smem, size = 0x4, offset = 0x4, fixed_abs, tag = 'smem constant byte address 0x4 - core index']
  #allocation1 [shape = 'u32[144,128]{1,0:T(1,128)}', space=vmem, size = 0x12000, scoped, tag = 'internal scratch']
  %s0 = inlined_call_operand.hbm [shape: f32[8,5], index: 0, kind: input, shape index: {}]
  %s1 = inlined_call_operand.hbm [shape: f32[7,6], index: 1, kind: input, shape index: {}]
  %s2 = inlined_call_operand.hbm [shape: f32[7,8], index: 2, kind: input, shape index: {}]
  %s3 = inlined_call_operand.vmem [shape: f32[3,8], index: 3, kind: input, shape index: {}]
  %s4 = inlined_call_operand.hbm [shape: f32[3,8], index: 4, kind: output, shape index: {}]
  %s5 = sld [smem:[#allocation0]]
  $region38: #{mlp_forward.1} parent=0
    _
  %s7 = ssub.s32 1, %s5
  %s8 = scalar_select 0, %s7, %s5
  $region1: #{mlp_forward.1} parent=0
    #allocation2 [shape = 'u8[4096]{0}', space=vmem, size = 0x1000, scoped, tag = 'input window, operand 0, single buffered']
    #allocation3 [shape = 's32[1]{0}', space=sflag, size = 0x4, scoped, tag = 'scoped memory for mlp_forward.1']
    #allocation4 [shape = 's32[1]{0}', space=sflag, size = 0x4, scoped, tag = 'scoped memory for mlp_forward.1']
    #allocation5 [shape = 'u8[4096]{0}', space=vmem, size = 0x1000, scoped, tag = 'input window, operand 1, single buffered']
    #allocation6 [shape = 's32[1]{0}', space=sflag, size = 0x4, scoped, tag = 'scoped memory for mlp_forward.1']
    #allocation7 [shape = 'u8[4096]{0}', space=vmem, size = 0x1000, scoped, tag = 'input window, operand 2, single buffered']
    #allocation8 [shape = 'u8[2048]{0}', space=vmem, size = 0x800, scoped, tag = 'output window, operand 0, single buffered']
    %9 = vsyncpa [#allocation3], 0
    %10 = vsyncpa [#allocation6], 0
    %11 = vsyncpa [#allocation4], 0
    // Predicated region
    $region2: #{mlp_forward.1} parent=1 // pred_check
      _
    $region3: #{mlp_forward.1} parent=1 // pred_check_branch
      %13 = sbr.rel (0) target = $region5
    $region4: #{mlp_forward.1} parent=1 // pred_region
      %s15 = ssub.s32 128, 128
      %16 = vsyncadd [#allocation3], %s15
      %s18 = sshll.u32 [#allocation2], 4
      %s19 = int_to_ptr.vmem [resolvable:$true] %s18
      %21 = dma.hbm_to_vmem [thread:$0]  %s0, 128, %s19, [#allocation3]
    $region5: #{mlp_forward.1} parent=1 // pred_fallthru
      _
    // Predicated region
    $region6: #{mlp_forward.1} parent=1 // pred_check
      _
    $region7: #{mlp_forward.1} parent=1 // pred_check_branch
      %23 = sbr.rel (0) target = $region9
    $region8: #{mlp_forward.1} parent=1 // pred_region
      %s25 = ssub.s32 128, 128
      %26 = vsyncadd [#allocation6], %s25
      %s28 = sshll.u32 [#allocation5], 4
      %s29 = int_to_ptr.vmem [resolvable:$true] %s28
      %31 = dma.hbm_to_vmem [thread:$0]  %s1, 128, %s29, [#allocation6]
    $region9: #{mlp_forward.1} parent=1 // pred_fallthru
      _
    // Predicated region
    $region10: #{mlp_forward.1} parent=1 // pred_check
      _
    $region11: #{mlp_forward.1} parent=1 // pred_check_branch
      %33 = sbr.rel (0) target = $region13
    $region12: #{mlp_forward.1} parent=1 // pred_region
      %s35 = ssub.s32 128, 128
      %36 = vsyncadd [#allocation6], %s35
      %s38 = sshll.u32 [#allocation7], 4
      %s39 = int_to_ptr.vmem [resolvable:$true] %s38
      %41 = dma.hbm_to_vmem [thread:$0]  %s2, 128, %s39, [#allocation6]
    $region13: #{mlp_forward.1} parent=1 // pred_fallthru
      _
    // Predicated region
    $region14: #{mlp_forward.1} parent=1 // pred_check
      _
    $region15: #{mlp_forward.1} parent=1 // pred_check_branch
      %43 = sbr.rel (0) target = $region17
    $region16: #{mlp_forward.1} parent=1 // pred_region
      _
    $region17: #{mlp_forward.1} parent=1 // pred_fallthru
      _
    // Predicated region
    $region18: #{mlp_forward.1} parent=1 // pred_check
      _
    $region19: #{mlp_forward.1} parent=1 // pred_check_branch
      %45 = sbr.rel (0) target = $region21
    $region20: #{mlp_forward.1} parent=1 // pred_region
      %46 = dma.done [#allocation3], 128
    $region21: #{mlp_forward.1} parent=1 // pred_fallthru
      _
    // Predicated region
    $region22: #{mlp_forward.1} parent=1 // pred_check
      _
    $region23: #{mlp_forward.1} parent=1 // pred_check_branch
      %48 = sbr.rel (0) target = $region25
    $region24: #{mlp_forward.1} parent=1 // pred_region
      %49 = dma.done [#allocation6], 128
    $region25: #{mlp_forward.1} parent=1 // pred_fallthru
      _
    // Predicated region
    $region26: #{mlp_forward.1} parent=1 // pred_check
      _
    $region27: #{mlp_forward.1} parent=1 // pred_check_branch
      %51 = sbr.rel (0) target = $region29
    $region28: #{mlp_forward.1} parent=1 // pred_region
      %52 = dma.done [#allocation6], 128
    $region29: #{mlp_forward.1} parent=1 // pred_fallthru
      _
    %v53 = vld [vmem:[#allocation2] sm:$0xff]
    %v54 = vld [vmem:[#allocation5] sm:$0x7f]
    %v55 = vld [vmem:[#allocation7] sm:$0x7f]
    %v56 = vld [vmem:[%s3] sm:$0x7]
    %58 = vset.pattern.permute.xlu0 5
    %59 = vperm.xlu0 %58, %v54
    %v60 = vpop.permute.xlu0 %59
    %vm62 = vcmask 39936
    %v63 = vsel %vm62, %v54, 0
    %v66 = vsel %vm62, %v53, 0
    %68 = vmatprep.subr.mxu0 0.0
    %69 = vmatpush1.xpose.msra.mxu0 %v66
    %70 = vmatprep.subr.mxu0 0.0
    %71 = vmatpush1.xpose.msra.mxu0 0.0
    %72 = vmatprep.subr.mxu0 0.0
    %73 = vmatpush1.xpose.msra.mxu0 0.0
    %74 = vmatprep.subr.mxu0 0.0
    %75 = vmatpush1.xpose.msra.mxu0 0.0
    %76 = vmatprep.subr.mxu0 0.0
    %77 = vmatpush1.xpose.msra.mxu0 0.0
    %78 = vmatprep.subr.mxu0 0.0
    %79 = vmatpush1.xpose.msra.mxu0 0.0
    %80 = vmatprep.subr.mxu0 0.0
    %81 = vmatpush1.xpose.msra.mxu0 0.0
    %82 = vmatprep.subr.mxu0 0.0
    %83 = vmatpush1.xpose.msra.mxu0 0.0
    %84 = vmatprep.subr.mxu0 0.0
    %85 = vmatpush1.xpose.msra.mxu0 0.0
    %86 = vmatprep.subr.mxu0 0.0
    %87 = vmatpush1.xpose.msra.mxu0 0.0
    %88 = vmatprep.subr.mxu0 0.0
    %89 = vmatpush1.xpose.msra.mxu0 0.0
    %90 = vmatprep.subr.mxu0 0.0
    %91 = vmatpush1.xpose.msra.mxu0 0.0
    %92 = vmatprep.subr.mxu0 0.0
    %93 = vmatpush1.xpose.msra.mxu0 0.0
    %94 = vmatprep.subr.mxu0 0.0
    %95 = vmatpush1.xpose.msra.mxu0 0.0
    %96 = vmatprep.subr.mxu0 0.0
    %97 = vmatpush1.xpose.msra.mxu0 0.0
    %98 = vmatprep.subr.mxu0 0.0
    %99 = vmatpush1.xpose.msra.mxu0 0.0
    %100 = vmatprep.subr.mxu0 0.0
    %101 = vmatpush1.xpose.msra.mxu0 0.0
    %102 = vmatprep.subr.mxu0 0.0
    %103 = vmatpush1.xpose.msra.mxu0 0.0
    %104 = vmatprep.subr.mxu0 0.0
    %105 = vmatpush1.xpose.msra.mxu0 0.0
    %106 = vmatprep.subr.mxu0 0.0
    %107 = vmatpush1.xpose.msra.mxu0 0.0
    %108 = vmatprep.subr.mxu0 0.0
    %109 = vmatpush1.xpose.msra.mxu0 0.0
    %110 = vmatprep.subr.mxu0 0.0
    %111 = vmatpush1.xpose.msra.mxu0 0.0
    %112 = vmatprep.subr.mxu0 0.0
    %113 = vmatpush1.xpose.msra.mxu0 0.0
    %114 = vmatprep.subr.mxu0 0.0
    %115 = vmatpush1.xpose.msra.mxu0 0.0
    %116 = vmatprep.subr.mxu0 0.0
    %117 = vmatpush1.xpose.msra.mxu0 0.0
    %118 = vmatprep.subr.mxu0 0.0
    %119 = vmatpush1.xpose.msra.mxu0 0.0
    %120 = vmatprep.subr.mxu0 0.0
    %121 = vmatpush1.xpose.msra.mxu0 0.0
    %122 = vmatprep.subr.mxu0 0.0
    %123 = vmatpush1.xpose.msra.mxu0 0.0
    %124 = vmatprep.subr.mxu0 0.0
    %125 = vmatpush1.xpose.msra.mxu0 0.0
    %126 = vmatprep.subr.mxu0 0.0
    %127 = vmatpush1.xpose.msra.mxu0 0.0
    %128 = vmatprep.subr.mxu0 0.0
    %129 = vmatpush1.xpose.msra.mxu0 0.0
    %130 = vmatprep.subr.mxu0 0.0
    %131 = vmatpush1.xpose.msra.mxu0 0.0
    %132 = vmatprep.mubr.f32.mxu0 0.0
    %133 = vmatmul.mubr.f32.gmra.mrb[0].mxu0 %v63
    %v134 = vpop.f32.mrb[0].mxu0
    %v135 = vadd.f32 %v60, %v134
    %v136 = vpop.f32.mrb[0].mxu0
    %137 = vdwg.mxu0
    %v138 = vmax.f32 %v135, 0.0
    %140 = vset.pattern.permute.xlu0 7
    %141 = vperm.xlu0 %140, %v55
    %v142 = vpop.permute.xlu0 %141
    %vm144 = vcmask 56320
    %v145 = vsel %vm144, %v55, 0
    %vm147 = vcmask 1046528
    %v149 = vsel %vm147, %v138, 0
    %151 = vmatprep.subr.mxu0 0.0
    %152 = vmatpush1.msra.mxu0 %v149
    %153 = vmatprep.subr.mxu0 0.0
    %154 = vmatpush1.msra.mxu0 0.0
    %155 = vmatprep.subr.mxu0 0.0
    %156 = vmatpush1.msra.mxu0 0.0
    %157 = vmatprep.subr.mxu0 0.0
    %158 = vmatpush1.msra.mxu0 0.0
    %159 = vmatprep.subr.mxu0 0.0
    %160 = vmatpush1.msra.mxu0 0.0
    %161 = vmatprep.subr.mxu0 0.0
    %162 = vmatpush1.msra.mxu0 0.0
    %163 = vmatprep.subr.mxu0 0.0
    %164 = vmatpush1.msra.mxu0 0.0
    %165 = vmatprep.subr.mxu0 0.0
    %166 = vmatpush1.msra.mxu0 0.0
    %167 = vmatprep.subr.mxu0 0.0
    %168 = vmatpush1.msra.mxu0 0.0
    %169 = vmatprep.subr.mxu0 0.0
    %170 = vmatpush1.msra.mxu0 0.0
    %171 = vmatprep.subr.mxu0 0.0
    %172 = vmatpush1.msra.mxu0 0.0
    %173 = vmatprep.subr.mxu0 0.0
    %174 = vmatpush1.msra.mxu0 0.0
    %175 = vmatprep.subr.mxu0 0.0
    %176 = vmatpush1.msra.mxu0 0.0
    %177 = vmatprep.subr.mxu0 0.0
    %178 = vmatpush1.msra.mxu0 0.0
    %179 = vmatprep.subr.mxu0 0.0
    %180 = vmatpush1.msra.mxu0 0.0
    %181 = vmatprep.subr.mxu0 0.0
    %182 = vmatpush1.msra.mxu0 0.0
    %183 = vmatprep.subr.mxu0 0.0
    %184 = vmatpush1.msra.mxu0 0.0
    %185 = vmatprep.subr.mxu0 0.0
    %186 = vmatpush1.msra.mxu0 0.0
    %187 = vmatprep.subr.mxu0 0.0
    %188 = vmatpush1.msra.mxu0 0.0
    %189 = vmatprep.subr.mxu0 0.0
    %190 = vmatpush1.msra.mxu0 0.0
    %191 = vmatprep.subr.mxu0 0.0
    %192 = vmatpush1.msra.mxu0 0.0
    %193 = vmatprep.subr.mxu0 0.0
    %194 = vmatpush1.msra.mxu0 0.0
    %195 = vmatprep.subr.mxu0 0.0
    %196 = vmatpush1.msra.mxu0 0.0
    %197 = vmatprep.subr.mxu0 0.0
    %198 = vmatpush1.msra.mxu0 0.0
    %199 = vmatprep.subr.mxu0 0.0
    %200 = vmatpush1.msra.mxu0 0.0
    %201 = vmatprep.subr.mxu0 0.0
    %202 = vmatpush1.msra.mxu0 0.0
    %203 = vmatprep.subr.mxu0 0.0
    %204 = vmatpush1.msra.mxu0 0.0
    %205 = vmatprep.subr.mxu0 0.0
    %206 = vmatpush1.msra.mxu0 0.0
    %207 = vmatprep.subr.mxu0 0.0
    %208 = vmatpush1.msra.mxu0 0.0
    %209 = vmatprep.subr.mxu0 0.0
    %210 = vmatpush1.msra.mxu0 0.0
    %211 = vmatprep.subr.mxu0 0.0
    %212 = vmatpush1.msra.mxu0 0.0
    %213 = vmatprep.subr.mxu0 0.0
    %214 = vmatpush1.msra.mxu0 0.0
    %215 = vmatprep.mubr.f32.mxu0 0.0
    %216 = vmatmul.mubr.f32.gmra.mrb[0].mxu0 %v145
    %v217 = vpop.f32.mrb[0].mxu0
    %v218 = vadd.f32 %v142, %v217
    %v219 = vpop.f32.mrb[0].mxu0
    %220 = vdwg.mxu0
    %v221 = vmax.f32 %v218, 0.0
    %223 = vset.pattern.permute.xlu0 7
    %224 = vperm.xlu0 %223, %v56
    %v225 = vpop.permute.xlu0 %224
    %v227 = vsel %vm144, %v56, 0
    %v230 = vsel %vm147, %v221, 0
    %232 = vmatprep.subr.mxu0 0.0
    %233 = vmatpush1.msra.mxu0 %v230
    %234 = vmatprep.subr.mxu0 0.0
    %235 = vmatpush1.msra.mxu0 0.0
    %236 = vmatprep.subr.mxu0 0.0
    %237 = vmatpush1.msra.mxu0 0.0
    %238 = vmatprep.subr.mxu0 0.0
    %239 = vmatpush1.msra.mxu0 0.0
    %240 = vmatprep.subr.mxu0 0.0
    %241 = vmatpush1.msra.mxu0 0.0
    %242 = vmatprep.subr.mxu0 0.0
    %243 = vmatpush1.msra.mxu0 0.0
    %244 = vmatprep.subr.mxu0 0.0
    %245 = vmatpush1.msra.mxu0 0.0
    %246 = vmatprep.subr.mxu0 0.0
    %247 = vmatpush1.msra.mxu0 0.0
    %248 = vmatprep.subr.mxu0 0.0
    %249 = vmatpush1.msra.mxu0 0.0
    %250 = vmatprep.subr.mxu0 0.0
    %251 = vmatpush1.msra.mxu0 0.0
    %252 = vmatprep.subr.mxu0 0.0
    %253 = vmatpush1.msra.mxu0 0.0
    %254 = vmatprep.subr.mxu0 0.0
    %255 = vmatpush1.msra.mxu0 0.0
    %256 = vmatprep.subr.mxu0 0.0
    %257 = vmatpush1.msra.mxu0 0.0
    %258 = vmatprep.subr.mxu0 0.0
    %259 = vmatpush1.msra.mxu0 0.0
    %260 = vmatprep.subr.mxu0 0.0
    %261 = vmatpush1.msra.mxu0 0.0
    %262 = vmatprep.subr.mxu0 0.0
    %263 = vmatpush1.msra.mxu0 0.0
    %264 = vmatprep.subr.mxu0 0.0
    %265 = vmatpush1.msra.mxu0 0.0
    %266 = vmatprep.subr.mxu0 0.0
    %267 = vmatpush1.msra.mxu0 0.0
    %268 = vmatprep.subr.mxu0 0.0
    %269 = vmatpush1.msra.mxu0 0.0
    %270 = vmatprep.subr.mxu0 0.0
    %271 = vmatpush1.msra.mxu0 0.0
    %272 = vmatprep.subr.mxu0 0.0
    %273 = vmatpush1.msra.mxu0 0.0
    %274 = vmatprep.subr.mxu0 0.0
    %275 = vmatpush1.msra.mxu0 0.0
    %276 = vmatprep.subr.mxu0 0.0
    %277 = vmatpush1.msra.mxu0 0.0
    %278 = vmatprep.subr.mxu0 0.0
    %279 = vmatpush1.msra.mxu0 0.0
    %280 = vmatprep.subr.mxu0 0.0
    %281 = vmatpush1.msra.mxu0 0.0
    %282 = vmatprep.subr.mxu0 0.0
    %283 = vmatpush1.msra.mxu0 0.0
    %284 = vmatprep.subr.mxu0 0.0
    %285 = vmatpush1.msra.mxu0 0.0
    %286 = vmatprep.subr.mxu0 0.0
    %287 = vmatpush1.msra.mxu0 0.0
    %288 = vmatprep.subr.mxu0 0.0
    %289 = vmatpush1.msra.mxu0 0.0
    %290 = vmatprep.subr.mxu0 0.0
    %291 = vmatpush1.msra.mxu0 0.0
    %292 = vmatprep.subr.mxu0 0.0
    %293 = vmatpush1.msra.mxu0 0.0
    %294 = vmatprep.subr.mxu0 0.0
    %295 = vmatpush1.msra.mxu0 0.0
    %296 = vmatprep.mubr.f32.mxu0 0.0
    %297 = vmatmul.mubr.f32.gmra.mrb[0].mxu0 %v227
    %v298 = vpop.f32.mrb[0].mxu0
    %v299 = vadd.f32 %v225, %v298
    %v300 = vpop.f32.mrb[0].mxu0
    %301 = vdwg.mxu0
    %vm302 = vcmask 59392
    %303 = vst.msk [vmem:[#allocation8] sm:$0x7] %vm302, %v299
    // Predicated region
    $region30: #{mlp_forward.1} parent=1 // pred_check
      _
    $region31: #{mlp_forward.1} parent=1 // pred_check_branch
      %305 = sbr.rel (0) target = $region33
    $region32: #{mlp_forward.1} parent=1 // pred_region
      %s307 = ssub.s32 64, 64
      %308 = vsyncadd [#allocation4], %s307
      %s310 = sshll.u32 [#allocation8], 4
      %s311 = int_to_ptr.vmem [resolvable:$true] %s310
      %313 = dma.vmem_to_hbm [thread:$0]  %s311, 64, %s4, [#allocation4]
    $region33: #{mlp_forward.1} parent=1 // pred_fallthru
      _
    // Predicated region
    $region34: #{mlp_forward.1} parent=1 // pred_check
      _
    $region35: #{mlp_forward.1} parent=1 // pred_check_branch
      %315 = sbr.rel (0) target = $region37
    $region36: #{mlp_forward.1} parent=1 // pred_region
      %316 = dma.done [#allocation4], 64
    $region37: #{mlp_forward.1} parent=1 // pred_fallthru
      _
    %317 = vsyncpa [#allocation3], 1
    %318 = vsyncpa [#allocation6], 1
    %319 = vsyncpa [#allocation4], 1

</llo_original>
